<compile_context>
chip_gen: v5e
topology: v5e:2x2
jax: 0.10.0
libtpu: 0.0.40
codegen_flags: <defaults>
</compile_context>

<pallas_src>
import functools

import jax
import jax.numpy as jnp
from jax.experimental import pallas as pl
from jax.experimental.pallas import tpu as pltpu


def _vmem_capacity_bytes():
    """Generation-aware VMEM capacity; conservative fallback = 64 MiB (v7x)."""
    try:
        return int(pltpu.get_tpu_info().vmem_capacity_bytes)
    except Exception:
        return 64 << 20


def _divisors(n):
    small, large = [], []
    i = 1
    while i * i <= n:
        if n % i == 0:
            small.append(i)
            if i != n // i:
                large.append(n // i)
        i += 1
    return small + large[::-1]


def _pick_row_block(R, in_row_bytes, out_row_bytes, pack, budget_bytes,
                    target_out_bytes=1 << 20, min_steps=4):
    """Rows per grid step.  Rb divides R and is a multiple of the dtype's
    sublane packing (or == R), keeping blocks legal and stores unmasked.

    Preference: >= min_steps grid steps (feed both v7x TensorCores), and among
    those the smallest block whose OUTPUT reaches ~target_out_bytes (amortizes
    the ~0.35 us/step overhead); otherwise the largest block that fits the
    double-buffered VMEM budget.
    """
    divisors = _divisors(R)
    cands = [d for d in divisors if d % pack == 0]
    if not cands:
        cands = [d for d in divisors if d % 8 == 0]
    if R not in cands:
        cands.append(R)

    def total(d):  # double-buffered in + out blocks
        return 2 * d * (in_row_bytes + out_row_bytes)

    fitting = [d for d in cands if total(d) <= budget_bytes]
    if not fitting:
        return min(cands)
    preferred = [d for d in fitting if R // d >= min_steps]
    pool = preferred if preferred else fitting
    reaching = [d for d in pool if d * out_row_bytes >= target_out_bytes]
    return min(reaching) if reaching else max(pool)


def _upsample_matmul_kernel(r_ref, x_ref, o_ref):
    # x_ref: (Rb, W) input rows (sublane=row, lane=col, stored layout).
    # r_ref: (W, s*s*W) constant 0/1 replication matrix (resident in VMEM).
    # o_ref: (Rb, s*s*W): each output row is the s vertically-replicated
    #        copies of the W-replicated input row, packed along the lane axis
    #        (row-major identical to the (N, C, H*s, W*s) output).
    y = jnp.dot(x_ref[...], r_ref[...], preferred_element_type=jnp.float32)
    o_ref[...] = y.astype(o_ref.dtype)


@functools.partial(jax.jit, static_argnums=(1,))
def upsample_nearest(x, scale_factor):
    """x: (N, C, H, W) -> (N, C, H*s, W*s), nearest-neighbor, integer s."""
    N, C, H, W = x.shape
    s = int(scale_factor)
    if s != scale_factor or s < 1:
        raise NotImplementedError("only positive integer scale_factor supported")
    Ho, Wo = H * s, W * s
    M = s * Wo                      # = s*s*W, output row length in the 2-D view
    db = jnp.dtype(x.dtype).itemsize
    R = N * C * H                   # folded row axis (N, C, H together)

    # Dtype-aware sublane packing: f32 -> 8, bf16 -> 16, int8/fp8 -> 32 rows.
    pack = max(8, 8 * (4 // max(db, 1)))

    cap = _vmem_capacity_bytes()
    # Generation-aware working-set budget (bigger blocks on 128 MiB parts).
    budget = max(4 << 20, min(cap // 5, 24 << 20))
    rep_bytes = W * M * db
    budget_blocks = max(1 << 20, budget - rep_bytes)

    Rb = _pick_row_block(R, W * db, M * db, pack, budget_blocks)
    grid = (R // Rb,)

    in_blk = Rb * W * db
    out_blk = Rb * M * db
    # Double-buffered in+out blocks + resident replication matrix + margin.
    needed = 2 * (in_blk + out_blk) + rep_bytes + (4 << 20)
    vmem_limit = int(min(max(needed, 16 << 20), max(32 << 20, cap - (16 << 20))))

    # One-hot replication matrix: column m = j*Wo + wo sources input column
    # (m % Wo) // s.  A single 0/1 matmul performs both the W (lane) and H
    # (row copies packed into the lane axis) replication.
    src_col = (jnp.arange(M, dtype=jnp.int32) % Wo) // s
    rep = (src_col[None, :] == jnp.arange(W, dtype=jnp.int32)[:, None]).astype(x.dtype)

    # Pure row-major reinterpretations (free): (N,C,H,W) -> (N*C*H, W) and
    # (N*C*H, s*s*W) -> (N,C,Ho,Wo).
    x2 = x.reshape(R, W)

    out2 = pl.pallas_call(
        _upsample_matmul_kernel,
        out_shape=jax.ShapeDtypeStruct((R, M), x.dtype),
        grid_spec=pltpu.PrefetchScalarGridSpec(
            num_scalar_prefetch=0,
            grid=grid,
            in_specs=[
                pl.BlockSpec((W, M), lambda i: (0, 0)),    # rep matrix, fetched once
                pl.BlockSpec((Rb, W), lambda i: (i, 0)),   # input rows
            ],
            out_specs=pl.BlockSpec((Rb, M), lambda i: (i, 0)),
        ),
        compiler_params=pltpu.CompilerParams(
            dimension_semantics=("parallel",),
            vmem_limit_bytes=vmem_limit,
        ),
        cost_estimate=pl.CostEstimate(
            flops=0,  # effectively a bandwidth-bound copy; matmul is a data-movement trick
            transcendentals=0,
            bytes_accessed=(1 + s * s) * R * W * db + rep_bytes,
        ),
    )(rep, x2)

    return out2.reshape(N, C, Ho, Wo)


if __name__ == "__main__":
    key = jax.random.PRNGKey(0)
    N, C, H, W = 2, 4, 16, 16
    scale = 2

    x = jax.random.normal(key, (N, C, H, W), dtype=jnp.float32)

    out = jax.block_until_ready(upsample_nearest(x, scale))

    # Reference: nearest-neighbor upsample (matches
    # F.interpolate(x, scale_factor=scale, mode='nearest')).
    ref = jnp.repeat(jnp.repeat(x, scale, axis=2), scale, axis=3)

    assert out.shape == (N, C, H * scale, W * scale), out.shape
    assert out.dtype == x.dtype, out.dtype
    assert jnp.allclose(out, ref), "mismatch vs reference nearest upsample"

    print("KERNEL_OK")
</pallas_src>

<mosaic_0001>
module attributes {stable_mosaic.version = 11 : i64} {
  func.func @_upsample_matmul_kernel(%arg0: i32, %arg1: memref<16x64xf32, #tpu.memory_space<vmem>>, %arg2: memref<32x16xf32, #tpu.memory_space<vmem>>, %arg3: memref<32x64xf32, #tpu.memory_space<vmem>>) attributes {dimension_semantics = [#tpu.dimension_semantics<parallel>], iteration_bounds = array<i64: 4>, scalar_prefetch = 0 : i64, scratch_operands = 0 : i64, tpu.core_type = #tpu.core_type<tc>, window_params = [{pipeline_mode = #tpu.pipeline_mode<synchronous>, transform_indices = @transform_0, window_bounds = array<i64: 16, 64>}, {transform_indices = @transform_1, window_bounds = array<i64: 32, 16>}, {transform_indices = @transform_2, window_bounds = array<i64: 32, 64>}]} {
    %c0 = arith.constant 0 : index
    %c0_0 = arith.constant 0 : index
    %0 = vector.load %arg2[%c0, %c0_0] : memref<32x16xf32, #tpu.memory_space<vmem>>, vector<32x16xf32>
    %c0_1 = arith.constant 0 : index
    %c0_2 = arith.constant 0 : index
    %1 = vector.load %arg1[%c0_1, %c0_2] : memref<16x64xf32, #tpu.memory_space<vmem>>, vector<16x64xf32>
    %cst = arith.constant dense<0.000000e+00> : vector<32x64xf32>
    %2 = tpu.matmul %0, %1, %cst {dimension_numbers = #tpu.dot_dimension_numbers<[1], [0], [0], [1], [0, 0, 1, 1], [], []>} : vector<32x16xf32>, vector<16x64xf32>, vector<32x64xf32> -> vector<32x64xf32>
    %c0_3 = arith.constant 0 : index
    %c0_4 = arith.constant 0 : index
    %3 = vector.load %arg3[%c0_3, %c0_4] : memref<32x64xf32, #tpu.memory_space<vmem>>, vector<32x64xf32>
    tpu.vector_store %arg3[%c0_3, %c0_4], %2 {strides = array<i32>} : memref<32x64xf32, #tpu.memory_space<vmem>>, vector<32x64xf32>,
    return
  }
  func.func @transform_0(%arg0: i32) -> (i32, i32) {
    %c0_i32 = arith.constant 0 : i32
    %c0_i32_0 = arith.constant 0 : i32
    %c0_i32_1 = arith.constant 0 : i32
    return %c0_i32, %c0_i32_0 : i32, i32
  }
  func.func @transform_1(%arg0: i32) -> (i32, i32) {
    %c0_i32 = arith.constant 0 : i32
    %c0_i32_0 = arith.constant 0 : i32
    return %arg0, %c0_i32 : i32, i32
  }
  func.func @transform_2(%arg0: i32) -> (i32, i32) {
    %c0_i32 = arith.constant 0 : i32
    %c0_i32_0 = arith.constant 0 : i32
    return %arg0, %c0_i32 : i32, i32
  }
}

</mosaic_0001>

<llo_original>
// kernel: upsample_nearest.1
$region0: #{upsample_nearest.1}
  #allocation0 [shape = 'u32[]', space=smem, size = 0x4, offset = 0x4, fixed_abs, tag = 'smem constant byte address 0x4 - core index']
  #allocation1 [shape = 'u32[72,128]{1,0:T(1,128)}', space=vmem, size = 0x9000, scoped, tag = 'internal scratch']
  %s0 = inlined_call_operand.vmem [shape: f32[16,64], index: 0, kind: input, shape index: {}]
  %s1 = inlined_call_operand.hbm [shape: f32[128,16], index: 1, kind: input, shape index: {}]
  %s2 = inlined_call_operand.vmem [shape: f32[128,64], index: 2, kind: output, shape index: {}]
  %s3 = sld [smem:[#allocation0]]
  $region45: #{upsample_nearest.1} parent=0
    _
  %s5 = ssub.s32 1, %s3
  %s6 = scalar_select 0, %s5, %s3
  $region1: #{upsample_nearest.1} parent=0
    #allocation2 [shape = 'u8[32768]{0}', space=vmem, size = 0x8000, scoped, tag = 'input window, operand 1']
    #allocation3 [shape = 's32[2]{0}', space=sflag, size = 0x8, scoped, tag = 'scoped memory for upsample_nearest.1']
    %7 = vsyncpa [#allocation3], 0
    %s8 = scalar_lea.sflag [#allocation3], 1
    %9 = vsyncpa %s8, 0
    loop: start=0, step=1, limit=6
    $region2: #{upsample_nearest.1} parent=1 // loop_pre_header
      _
    $region3: #{upsample_nearest.1} parent=1 // loop_header
      %s11 = sphi 0, %s15
      %p12 = scmp.ge.s32.totalorder %s11, 6
      %s19 = sphi 0, %s19
      %s21 = sphi 0, %s19
      %s22 = sphi 0, %s21
      %s36 = sphi 0, %s22
      %s42 = sphi 0, %s44
      %s45 = sphi 0, %s42
      %s46 = sphi 0, %s45
      %s62 = sphi 0, %s46
      %s68 = sphi 0, %s70
      %s71 = sphi 0, %s68
      %s72 = sphi 0, %s71
      %s88 = sphi 0, %s72
    $region4: #{upsample_nearest.1} parent=1 // loop_header_branch
      %14 = sbr.rel (%p12) target = $region8
    $region5: #{upsample_nearest.1} parent=1 // loop_body
      %s16 = ssub.s32 %s11, 1
      %s17 = ssub.s32 %s11, 2
      %s18 = sadd.s32 %s11, 1
      %s20 = sadd.s32 %s19, 1
      %p23 = scmp.eq.s32.totalorder %s11, 3
      %p24 = scmp.ne.s32.totalorder %s19, %s21
      %p25 = scmp.eq.s32.totalorder %s11, 0
      %p26 = por %p24, %p25
      %p27 = scmp.ne.s32.totalorder %s19, %s21
      %p28 = scmp.eq.s32.totalorder %s16, 3
      %p29 = por %p27, %p28
      %p30 = scmp.ne.s32.totalorder %s21, %s22
      %p31 = scmp.eq.s32.totalorder %s16, 0
      %p32 = por %p30, %p31
      %p33 = scmp.ne.s32.totalorder %s21, %s22
      %p34 = scmp.eq.s32.totalorder %s17, 3
      %p35 = por %p33, %p34
      %p37 = scmp.ne.s32.totalorder %s22, %s36
      %p38 = scmp.eq.s32.totalorder %s17, 0
      %p39 = por %p37, %p38
      %s40 = ssub.s32 %s11, %s18
      %p41 = scmp.eq.s32.totalorder %s40, 0
      %s43 = sadd.s32 %s42, 1
      %s44 = scalar_select %p41, %s42, %s43
      %p47 = pneg %p41
      %p48 = scmp.eq.s32.totalorder %s11, 3
      %p49 = por %p47, %p48
      %p50 = scmp.ne.s32.totalorder %s42, %s45
      %p51 = scmp.eq.s32.totalorder %s11, 0
      %p52 = por %p50, %p51
      %p53 = scmp.ne.s32.totalorder %s42, %s45
      %p54 = scmp.eq.s32.totalorder %s16, 3
      %p55 = por %p53, %p54
      %p56 = scmp.ne.s32.totalorder %s45, %s46
      %p57 = scmp.eq.s32.totalorder %s16, 0
      %p58 = por %p56, %p57
      %p59 = scmp.ne.s32.totalorder %s45, %s46
      %p60 = scmp.eq.s32.totalorder %s17, 3
      %p61 = por %p59, %p60
      %p63 = scmp.ne.s32.totalorder %s46, %s62
      %p64 = scmp.eq.s32.totalorder %s17, 0
      %p65 = por %p63, %p64
      %s66 = ssub.s32 %s11, %s18
      %p67 = scmp.eq.s32.totalorder %s66, 0
      %s69 = sadd.s32 %s68, 1
      %s70 = scalar_select %p67, %s68, %s69
      %p73 = pneg %p67
      %p74 = scmp.eq.s32.totalorder %s11, 3
      %p75 = por %p73, %p74
      %p76 = scmp.ne.s32.totalorder %s68, %s71
      %p77 = scmp.eq.s32.totalorder %s11, 0
      %p78 = por %p76, %p77
      %p79 = scmp.ne.s32.totalorder %s68, %s71
      %p80 = scmp.eq.s32.totalorder %s16, 3
      %p81 = por %p79, %p80
      %p82 = scmp.ne.s32.totalorder %s71, %s72
      %p83 = scmp.eq.s32.totalorder %s16, 0
      %p84 = por %p82, %p83
      %p85 = scmp.ne.s32.totalorder %s71, %s72
      %p86 = scmp.eq.s32.totalorder %s17, 3
      %p87 = por %p85, %p86
      %p89 = scmp.ne.s32.totalorder %s72, %s88
      %p90 = scmp.eq.s32.totalorder %s17, 0
      %p91 = por %p89, %p90
      %p92 = scmp.le.s32.totalorder 1, %s11
      %p93 = scmp.lt.s32.totalorder %s11, 5
      %p94 = pnand %p92, %p93
      %p95 = pneg %p94
      // Predicated region
      $region9: #{upsample_nearest.1} parent=5 // pred_check
        _
      $region10: #{upsample_nearest.1} parent=5 // pred_check_branch
        %97 = sbr.rel (%p94) target = $region12
      $region11: #{upsample_nearest.1} parent=5 // pred_region
        %s98 = ssub.s32 %s11, 1
        // Predicated region
        $region13: #{upsample_nearest.1} parent=11 // pred_check
          %p99 = pneg %p32
        $region14: #{upsample_nearest.1} parent=11 // pred_check_branch
          %101 = sbr.rel (%p99) target = $region16
        $region15: #{upsample_nearest.1} parent=11 // pred_region
          _
        $region16: #{upsample_nearest.1} parent=11 // pred_fallthru
          _
      $region12: #{upsample_nearest.1} parent=5 // pred_fallthru
        _
      %p102 = scmp.lt.s32.totalorder %s11, 4
      // Predicated region
      $region17: #{upsample_nearest.1} parent=5 // pred_check
        %p103 = pneg %p102
      $region18: #{upsample_nearest.1} parent=5 // pred_check_branch
        %105 = sbr.rel (%p103) target = $region20
      $region19: #{upsample_nearest.1} parent=5 // pred_region
        // Predicated region
        $region21: #{upsample_nearest.1} parent=19 // pred_check
          %p106 = pneg %p52
        $region22: #{upsample_nearest.1} parent=19 // pred_check_branch
          %108 = sbr.rel (%p106) target = $region24
        $region23: #{upsample_nearest.1} parent=19 // pred_region
          %s109 = sand.u32 %s42, 1
          %s110 = scalar_lea.sflag [#allocation3], %s109
          %s111 = sand.u32 %s42, 1
          %s112 = smul.addr %s111, 32
          %s113 = scalar_lea.vmem [#allocation2], %s112
          %s114 = smul.u32 4, %s11
          %116 = vsyncadd %s110, 0
          %s117 = smul.addr %s114, 8
          %s118 = scalar_lea.hbm %s1, %s117
          %s119 = sshll.u32 %s118, 4
          %s120 = int_to_ptr.hbm [resolvable:$true] %s119
          %s121 = sshll.u32 %s113, 4
          %s122 = int_to_ptr.vmem [resolvable:$true] %s121
          %127 = dma.hbm_to_vmem [thread:$0]  %s120, 512, %s122, %s110, 128, 128, 8
        $region24: #{upsample_nearest.1} parent=19 // pred_fallthru
          _
      $region20: #{upsample_nearest.1} parent=5 // pred_fallthru
        _
      %p128 = scmp.le.s32.totalorder 1, %s11
      %p129 = scmp.lt.s32.totalorder %s11, 5
      %p130 = pnand %p128, %p129
      %p131 = pneg %p130
      // Predicated region
      $region25: #{upsample_nearest.1} parent=5 // pred_check
        _
      $region26: #{upsample_nearest.1} parent=5 // pred_check_branch
        %133 = sbr.rel (%p130) target = $region28
      $region27: #{upsample_nearest.1} parent=5 // pred_region
        %s134 = ssub.s32 %s11, 1
        %s135 = sand.u32 %s45, 1
        %s136 = scalar_lea.sflag [#allocation3], %s135
        %s137 = sand.u32 %s45, 1
        %s138 = smul.addr %s137, 32
        %s139 = scalar_lea.vmem [#allocation2], %s138
        // Predicated region
        $region29: #{upsample_nearest.1} parent=27 // pred_check
          %p140 = pneg %p58
        $region30: #{upsample_nearest.1} parent=27 // pred_check_branch
          %142 = sbr.rel (%p140) target = $region32
        $region31: #{upsample_nearest.1} parent=27 // pred_region
          %144 = dma.done %s136, 512
        $region32: #{upsample_nearest.1} parent=27 // pred_fallthru
          _
        %p145 = pneg %p32
        %p146 = pneg %p29
        %s147 = sand.u32 %s45, 1
        %s148 = scalar_lea.sflag [#allocation3], %s147
        %s149 = sand.u32 %s45, 1
        %s150 = smul.addr %s149, 32
        %s151 = scalar_lea.vmem [#allocation2], %s150
        %p152 = pneg %p58
        %p153 = pneg %p55
        %p154 = pneg %p84
        %p155 = pneg %p81
        %s156 = smul.u32 4, %s16
        %p157 = scmp.lt.s32.totalorder %s156, 15
        %s158 = scalar_select %p157, %s156, 15
        %s159 = smul.addr %s158, 8
        %s160 = scalar_lea.vmem %s2, %s159
        %s161 = smul.u32 4, %s16
        %s162 = smul.u32 4, %s16
        %p163 = scmp.lt.s32.totalorder %s162, 15
        %s164 = scalar_select %p163, %s162, 15
        %s165 = smul.addr %s164, 8
        %s166 = scalar_lea.vmem %s2, %s165
        %s167 = smul.u32 4, %s16
        %v168 = vld [vmem:[%s139] sm:$0xff]
        %v169 = vld [vmem:[%s139 + $0x8] sm:$0xff]
        %v170 = vld [vmem:[%s139 + $0x10] sm:$0xff]
        %v171 = vld [vmem:[%s139 + $0x18] sm:$0xff]
        %v172 = vld [vmem:[%s0] sm:$0xff]
        %v173 = vld [vmem:[%s0 + $0x8] sm:$0xff]
        %vm174 = vcmask 130048
        %v176 = vsel %vm174, %v168, 0
        %v179 = vsel %vm174, %v169, 0
        %v182 = vsel %vm174, %v170, 0
        %v185 = vsel %vm174, %v171, 0
        %187 = vmatpush.msra.mxu0 0.0
        %188 = vmatpush.msra.mxu0 0.0
        %189 = vmatpush.msra.mxu0 0.0
        %190 = vmatpush.msra.mxu0 0.0
        %191 = vmatpush.msra.mxu0 0.0
        %192 = vmatpush.msra.mxu0 0.0
        %193 = vmatpush.msra.mxu0 0.0
        %194 = vmatpush.msra.mxu0 0.0
        %195 = vmatpush.msra.mxu0 0.0
        %196 = vmatpush.msra.mxu0 0.0
        %197 = vmatpush.msra.mxu0 0.0
        %198 = vmatpush.msra.mxu0 0.0
        %199 = vmatpush.msra.mxu0 0.0
        %200 = vmatpush.msra.mxu0 0.0
        %201 = vmatpush.msra.mxu0 %v173
        %202 = vmatpush.msra.mxu0 %v172
        %203 = vmatmul.f32.gmra.mxu0 %v176
        %v204 = vpop.f32.mrf.mxu0
        %v205 = vadd.f32 0.0, %v204
        %206 = vmatmul.f32.gmra.mxu0 %v179
        %v207 = vpop.f32.mrf.mxu0
        %v208 = vadd.f32 0.0, %v207
        %209 = vmatmul.f32.gmra.mxu0 %v182
        %v210 = vpop.f32.mrf.mxu0
        %v211 = vadd.f32 0.0, %v210
        %212 = vmatmul.f32.gmra.mxu0 %v185
        %v213 = vpop.f32.mrf.mxu0
        %v214 = vadd.f32 0.0, %v213
        %215 = vdwg.mxu0
        %vm216 = vcmask 523264
        %217 = vst.msk [vmem:[%s166] sm:$0xff] %vm216, %v205
        %218 = vst.msk [vmem:[%s166 + $0x8] sm:$0xff] %vm216, %v208
        %219 = vst.msk [vmem:[%s166 + $0x10] sm:$0xff] %vm216, %v211
        %220 = vst.msk [vmem:[%s166 + $0x18] sm:$0xff] %vm216, %v214
        %s221 = smul.u32 4, %s16
        %p222 = scmp.lt.s32.totalorder %s221, 15
        %s223 = scalar_select %p222, %s221, 15
        %s224 = smul.addr %s223, 8
        %s225 = scalar_lea.vmem %s2, %s224
        // Predicated region
        $region33: #{upsample_nearest.1} parent=27 // pred_check
          %p226 = pneg %p81
        $region34: #{upsample_nearest.1} parent=27 // pred_check_branch
          %228 = sbr.rel (%p226) target = $region36
        $region35: #{upsample_nearest.1} parent=27 // pred_region
          %s229 = smul.u32 4, %s16
        $region36: #{upsample_nearest.1} parent=27 // pred_fallthru
          _
      $region28: #{upsample_nearest.1} parent=5 // pred_fallthru
        _
      %p230 = scmp.le.s32.totalorder 2, %s11
      // Predicated region
      $region37: #{upsample_nearest.1} parent=5 // pred_check
        %p231 = pneg %p230
      $region38: #{upsample_nearest.1} parent=5 // pred_check_branch
        %233 = sbr.rel (%p231) target = $region40
      $region39: #{upsample_nearest.1} parent=5 // pred_region
        %s234 = ssub.s32 %s11, 2
        // Predicated region
        $region41: #{upsample_nearest.1} parent=39 // pred_check
          %p235 = pneg %p87
        $region42: #{upsample_nearest.1} parent=39 // pred_check_branch
          %237 = sbr.rel (%p235) target = $region44
        $region43: #{upsample_nearest.1} parent=39 // pred_region
          %s238 = smul.u32 4, %s17
          %p239 = scmp.lt.s32.totalorder %s238, 15
          %s240 = scalar_select %p239, %s238, 15
          %s241 = smul.addr %s240, 8
          %s242 = scalar_lea.vmem %s2, %s241
        $region44: #{upsample_nearest.1} parent=39 // pred_fallthru
          _
      $region40: #{upsample_nearest.1} parent=5 // pred_fallthru
        _
    $region6: #{upsample_nearest.1} parent=1 // loop_footer
      %s15 = sadd.s32 1, %s11
    $region7: #{upsample_nearest.1} parent=1 // loop_footer_branch
      %10 = sbr.rel target = $region3
    $region8: #{upsample_nearest.1} parent=1 // loop_exit
      _
    %243 = vsyncpa [#allocation3], 1
    %s244 = scalar_lea.sflag [#allocation3], 1
    %245 = vsyncpa %s244, 1

</llo_original>
